<compile_context>
chip_gen: v5e
topology: v5e:2x2
jax: 0.10.0
libtpu: 0.0.40
codegen_flags: <defaults>
</compile_context>

<pallas_src>
import functools
import math

import jax
import jax.numpy as jnp
from jax import lax
from jax.experimental import pallas as pl
from jax.experimental.pallas import tpu as pltpu

NUM_CLASSES = 100
PADDED_CLASSES = 128  # lane-dense output width (multiple of 128)

# lowbias32 hash constants, written as their wrapped int32 values (so all
# integer math stays in int32 with two's-complement wrapping).
_MIX1 = 2146120493      # 0x7FEB352D
_MIX2 = -2073450869     # 0x846CA68B
_GOLDEN = -1640531527   # 0x9E3779B9
_SALT = -2049408853     # 0x85EBCA6B
_TWO_PI = 6.283185307179586
_INV_2POW24 = 1.0 / 16777216.0


def _round_up(x, m):
    return (x + m - 1) // m * m


def _mix32(x):
    """lowbias32 integer hash (int32, wrapping arithmetic, logical shifts)."""
    x = x ^ lax.shift_right_logical(x, 16)
    x = x * _MIX1
    x = x ^ lax.shift_right_logical(x, 15)
    x = x * _MIX2
    x = x ^ lax.shift_right_logical(x, 16)
    return x


def _horde_head_kernel(seed_ref, w_ref, b_ref, o_ref, *, tm, kp):
    """One (tm, 128) logits tile of HordeModel.forward (no feature extractors).

    seed_ref : SMEM (1,)  int32  scalar-prefetch PRNG seed
    w_ref    : VMEM (kp, 128) bf16  pre-transposed, pre-scaled (x0.01), zero-padded
    b_ref    : VMEM (1, 128)  f32   zero-padded bias
    o_ref    : VMEM (tm, 128) f32   logits tile
    """
    tile = pl.program_id(0)
    # Per-tile stream key = hash(seed, tile): tile i of seed s never aliases
    # tile i-1 of seed s+1 (review: weak stream mixing of seed + program_id).
    key = _mix32(seed_ref[0] ^ (tile * _GOLDEN))

    # Counter-based PRNG over the (tm, kp) feature slab.
    r = lax.broadcasted_iota(jnp.int32, (tm, kp), 0)
    c = lax.broadcasted_iota(jnp.int32, (tm, kp), 1)
    idx = r * kp + c

    bits1 = _mix32(idx + key)
    bits2 = _mix32((idx ^ key) + _SALT)

    def _unit(bits):  # 24-bit uniform in (0, 1); never exactly 0 (log-safe)
        u24 = lax.shift_right_logical(bits, 8).astype(jnp.float32)
        return (u24 + 0.5) * _INV_2POW24

    u1 = _unit(bits1)
    u2 = _unit(bits2)

    # Box-Muller -> standard normal placeholder features.  The 0.01 feature
    # scale is already folded into w_ref, so the body is pure matmul + bias.
    z = jnp.sqrt(-2.0 * jnp.log(u1)) * jnp.cos(_TWO_PI * u2)

    o_ref[...] = (
        jnp.dot(z.astype(jnp.bfloat16), w_ref[...], preferred_element_type=jnp.float32)
        + b_ref[...]
    )


@functools.partial(jax.jit, static_argnames=("num_fe", "embedding_size"))
def horde_forward(x, params, seed, *, num_fe, embedding_size):
    """JAX/Pallas equivalent of HordeModel.forward (no feature extractors added).

    `seed` should be a fresh jnp.int32 each call to mimic torch.randn drawing
    new noise per forward pass.
    """
    batch = x.shape[0]
    feat_dim = num_fe * embedding_size
    w_prep, b_prep = params
    kp = w_prep.shape[0]
    assert kp == _round_up(feat_dim, 128)
    assert w_prep.shape == (kp, PADDED_CLASSES)

    # TODO(synk): HordeModel has no feature extractors at __init__, so the
    # per-extractor slice overwrites of `features` are not translated.

    # Pad batch only to the sublane multiple of 8 (no tm-sized over-padding).
    padded_batch = _round_up(batch, 8)
    # >= 2 batch tiles whenever possible so v7x's two TensorCores both get
    # work; large cap (1024) amortizes per-grid-step overhead while staying
    # tiny against VMEM (out tile at tm=1024 is 512 KiB f32).
    if padded_batch >= 16:
        tm = min(1024, _round_up(pl.cdiv(padded_batch, 2), 8))
    else:
        tm = padded_batch
    num_tiles = pl.cdiv(padded_batch, tm)

    seed_arr = jnp.reshape(jnp.asarray(seed, jnp.int32), (1,))

    kernel = functools.partial(_horde_head_kernel, tm=tm, kp=kp)

    logits_padded = pl.pallas_call(
        kernel,
        out_shape=jax.ShapeDtypeStruct((padded_batch, PADDED_CLASSES), jnp.float32),
        grid_spec=pltpu.PrefetchScalarGridSpec(
            num_scalar_prefetch=1,
            grid=(num_tiles,),
            in_specs=[
                # Weight and bias stay resident across all batch tiles.
                pl.BlockSpec((kp, PADDED_CLASSES), lambda i, seed_ref: (0, 0)),
                pl.BlockSpec((1, PADDED_CLASSES), lambda i, seed_ref: (0, 0)),
            ],
            out_specs=pl.BlockSpec((tm, PADDED_CLASSES), lambda i, seed_ref: (i, 0)),
        ),
        compiler_params=pltpu.CompilerParams(
            dimension_semantics=("parallel",),  # v7x: batch tiles split across TCs
        ),
    )(seed_arr, w_prep, b_prep)

    # Strip the 8-row batch padding and the 100 -> 128 class padding.
    # (Callers that can consume the padded (B8, 128) layout may skip this.)
    return logits_padded[:batch, :NUM_CLASSES]


def init_params(key, num_fe, embedding_size):
    """torch.nn.Linear-default init, prepared ONCE for the kernel.

    Prep: fold the 0.01 feature scale into W, transpose to (in, out), zero-pad
    the K dim to a multiple of 128 and classes 100 -> 128, cast W to bf16.
    """
    feat_dim = num_fe * embedding_size
    kp = _round_up(feat_dim, 128)
    k_w, k_b = jax.random.split(key)
    bound = 1.0 / math.sqrt(feat_dim)
    # PyTorch Linear: weight (out, in), bias (out,), both U(-1/sqrt(fan_in), +).
    w = jax.random.uniform(k_w, (NUM_CLASSES, feat_dim), jnp.float32, -bound, bound)
    b = jax.random.uniform(k_b, (NUM_CLASSES,), jnp.float32, -bound, bound)

    w_prep = (
        jnp.zeros((kp, PADDED_CLASSES), jnp.float32)
        .at[:feat_dim, :NUM_CLASSES]
        .set((w * jnp.float32(0.01)).T)
        .astype(jnp.bfloat16)
    )
    b_prep = jnp.zeros((1, PADDED_CLASSES), jnp.float32).at[0, :NUM_CLASSES].set(b)
    return w_prep, b_prep


if __name__ == "__main__":
    # HordeModel(num_feature_extractors=4, embedding_size=32) -> feat_dim = 128
    num_fe = 4
    embedding_size = 32

    key = jax.random.PRNGKey(0)
    k_x, k_params = jax.random.split(key)

    # Input image batch (NCHW); only the batch dim is consumed by this forward.
    x = jax.random.normal(k_x, (2, 4, 16, 16), dtype=jnp.float32)

    params = init_params(k_params, num_fe, embedding_size)
    seed = jnp.int32(0)  # pass a fresh seed per forward to mimic torch.randn

    logits = horde_forward(
        x, params, seed, num_fe=num_fe, embedding_size=embedding_size
    )
    jax.block_until_ready(logits)

    assert logits.shape == (2, NUM_CLASSES)
    assert logits.dtype == jnp.float32
    assert bool(jnp.all(jnp.isfinite(logits)))

    print("KERNEL_OK")
</pallas_src>

<mosaic_0001>
module attributes {stable_mosaic.version = 11 : i64} {
  func.func @_horde_head_kernel(%arg0: i32, %arg1: memref<1xi32, #tpu.memory_space<smem>>, %arg2: memref<128x128xbf16, #tpu.memory_space<vmem>>, %arg3: memref<1x128xf32, #tpu.memory_space<vmem>>, %arg4: memref<8x128xf32, #tpu.memory_space<vmem>>) attributes {dimension_semantics = [#tpu.dimension_semantics<parallel>], iteration_bounds = array<i64: 1>, scalar_prefetch = 1 : i64, scratch_operands = 0 : i64, tpu.core_type = #tpu.core_type<tc>, window_params = [{pipeline_mode = #tpu.pipeline_mode<synchronous>, transform_indices = @transform_0, window_bounds = array<i64: 128, 128>}, {pipeline_mode = #tpu.pipeline_mode<synchronous>, transform_indices = @transform_1, window_bounds = array<i64: 1, 128>}, {transform_indices = @transform_2, window_bounds = array<i64: 8, 128>}]} {
    %c0 = arith.constant 0 : index
    %0 = memref.load %arg1[%c0] : memref<1xi32, #tpu.memory_space<smem>>
    %c-1640531527_i32 = arith.constant -1640531527 : i32
    %1 = arith.muli %arg0, %c-1640531527_i32 : i32
    %2 = arith.xori %0, %1 : i32
    %c16_i32 = arith.constant 16 : i32
    %3 = arith.shrui %2, %c16_i32 : i32
    %4 = arith.xori %2, %3 : i32
    %c2146120493_i32 = arith.constant 2146120493 : i32
    %5 = arith.muli %4, %c2146120493_i32 : i32
    %c15_i32 = arith.constant 15 : i32
    %6 = arith.shrui %5, %c15_i32 : i32
    %7 = arith.xori %5, %6 : i32
    %c-2073450869_i32 = arith.constant -2073450869 : i32
    %8 = arith.muli %7, %c-2073450869_i32 : i32
    %c16_i32_0 = arith.constant 16 : i32
    %9 = arith.shrui %8, %c16_i32_0 : i32
    %10 = arith.xori %8, %9 : i32
    %11 = tpu.iota {dimensions = array<i32: 0>} : vector<8x128xi32>
    %12 = tpu.iota {dimensions = array<i32: 1>} : vector<8x128xi32>
    %c128_i32 = arith.constant 128 : i32
    %13 = vector.broadcast %c128_i32 : i32 to vector<8x128xi32>
    %14 = arith.muli %11, %13 : vector<8x128xi32>
    %15 = arith.addi %14, %12 : vector<8x128xi32>
    %16 = vector.broadcast %10 : i32 to vector<8x128xi32>
    %17 = arith.addi %15, %16 : vector<8x128xi32>
    %c16_i32_1 = arith.constant 16 : i32
    %18 = vector.broadcast %c16_i32_1 : i32 to vector<8x128xi32>
    %19 = arith.shrui %17, %18 : vector<8x128xi32>
    %20 = arith.xori %17, %19 : vector<8x128xi32>
    %c2146120493_i32_2 = arith.constant 2146120493 : i32
    %21 = vector.broadcast %c2146120493_i32_2 : i32 to vector<8x128xi32>
    %22 = arith.muli %20, %21 : vector<8x128xi32>
    %c15_i32_3 = arith.constant 15 : i32
    %23 = vector.broadcast %c15_i32_3 : i32 to vector<8x128xi32>
    %24 = arith.shrui %22, %23 : vector<8x128xi32>
    %25 = arith.xori %22, %24 : vector<8x128xi32>
    %c-2073450869_i32_4 = arith.constant -2073450869 : i32
    %26 = vector.broadcast %c-2073450869_i32_4 : i32 to vector<8x128xi32>
    %27 = arith.muli %25, %26 : vector<8x128xi32>
    %c16_i32_5 = arith.constant 16 : i32
    %28 = vector.broadcast %c16_i32_5 : i32 to vector<8x128xi32>
    %29 = arith.shrui %27, %28 : vector<8x128xi32>
    %30 = arith.xori %27, %29 : vector<8x128xi32>
    %31 = vector.broadcast %10 : i32 to vector<8x128xi32>
    %32 = arith.xori %15, %31 : vector<8x128xi32>
    %c-2049408853_i32 = arith.constant -2049408853 : i32
    %33 = vector.broadcast %c-2049408853_i32 : i32 to vector<8x128xi32>
    %34 = arith.addi %32, %33 : vector<8x128xi32>
    %c16_i32_6 = arith.constant 16 : i32
    %35 = vector.broadcast %c16_i32_6 : i32 to vector<8x128xi32>
    %36 = arith.shrui %34, %35 : vector<8x128xi32>
    %37 = arith.xori %34, %36 : vector<8x128xi32>
    %c2146120493_i32_7 = arith.constant 2146120493 : i32
    %38 = vector.broadcast %c2146120493_i32_7 : i32 to vector<8x128xi32>
    %39 = arith.muli %37, %38 : vector<8x128xi32>
    %c15_i32_8 = arith.constant 15 : i32
    %40 = vector.broadcast %c15_i32_8 : i32 to vector<8x128xi32>
    %41 = arith.shrui %39, %40 : vector<8x128xi32>
    %42 = arith.xori %39, %41 : vector<8x128xi32>
    %c-2073450869_i32_9 = arith.constant -2073450869 : i32
    %43 = vector.broadcast %c-2073450869_i32_9 : i32 to vector<8x128xi32>
    %44 = arith.muli %42, %43 : vector<8x128xi32>
    %c16_i32_10 = arith.constant 16 : i32
    %45 = vector.broadcast %c16_i32_10 : i32 to vector<8x128xi32>
    %46 = arith.shrui %44, %45 : vector<8x128xi32>
    %47 = arith.xori %44, %46 : vector<8x128xi32>
    %c8_i32 = arith.constant 8 : i32
    %48 = vector.broadcast %c8_i32 : i32 to vector<8x128xi32>
    %49 = arith.shrui %30, %48 : vector<8x128xi32>
    %50 = arith.sitofp %49 : vector<8x128xi32> to vector<8x128xf32>
    %cst = arith.constant 5.000000e-01 : f32
    %51 = vector.broadcast %cst : f32 to vector<8x128xf32>
    %52 = arith.addf %50, %51 : vector<8x128xf32>
    %cst_11 = arith.constant 5.96046448E-8 : f32
    %53 = vector.broadcast %cst_11 : f32 to vector<8x128xf32>
    %54 = arith.mulf %52, %53 : vector<8x128xf32>
    %c8_i32_12 = arith.constant 8 : i32
    %55 = vector.broadcast %c8_i32_12 : i32 to vector<8x128xi32>
    %56 = arith.shrui %47, %55 : vector<8x128xi32>
    %57 = arith.sitofp %56 : vector<8x128xi32> to vector<8x128xf32>
    %cst_13 = arith.constant 5.000000e-01 : f32
    %58 = vector.broadcast %cst_13 : f32 to vector<8x128xf32>
    %59 = arith.addf %57, %58 : vector<8x128xf32>
    %cst_14 = arith.constant 5.96046448E-8 : f32
    %60 = vector.broadcast %cst_14 : f32 to vector<8x128xf32>
    %61 = arith.mulf %59, %60 : vector<8x128xf32>
    %62 = math.log %54 : vector<8x128xf32>
    %cst_15 = arith.constant -2.000000e+00 : f32
    %63 = vector.broadcast %cst_15 : f32 to vector<8x128xf32>
    %64 = arith.mulf %63, %62 : vector<8x128xf32>
    %65 = math.sqrt %64 : vector<8x128xf32>
    %cst_16 = arith.constant 6.28318548 : f32
    %66 = vector.broadcast %cst_16 : f32 to vector<8x128xf32>
    %67 = arith.mulf %66, %61 : vector<8x128xf32>
    %68 = math.cos %67 : vector<8x128xf32>
    %69 = arith.mulf %65, %68 : vector<8x128xf32>
    %70 = arith.truncf %69 : vector<8x128xf32> to vector<8x128xbf16>
    %c0_17 = arith.constant 0 : index
    %c0_18 = arith.constant 0 : index
    %71 = vector.load %arg2[%c0_17, %c0_18] : memref<128x128xbf16, #tpu.memory_space<vmem>>, vector<128x128xbf16>
    %cst_19 = arith.constant dense<0.000000e+00> : vector<8x128xf32>
    %72 = tpu.matmul %70, %71, %cst_19 {dimension_numbers = #tpu.dot_dimension_numbers<[1], [0], [0], [1], [0, 0, 1, 1], [], []>} : vector<8x128xbf16>, vector<128x128xbf16>, vector<8x128xf32> -> vector<8x128xf32>
    %c0_20 = arith.constant 0 : index
    %c0_21 = arith.constant 0 : index
    %73 = vector.load %arg3[%c0_20, %c0_21] : memref<1x128xf32, #tpu.memory_space<vmem>>, vector<1x128xf32>
    %74 = vector.broadcast %73 : vector<1x128xf32> to vector<8x128xf32>
    %75 = arith.addf %72, %74 : vector<8x128xf32>
    %c0_22 = arith.constant 0 : index
    %c0_23 = arith.constant 0 : index
    %76 = vector.load %arg4[%c0_22, %c0_23] : memref<8x128xf32, #tpu.memory_space<vmem>>, vector<8x128xf32>
    tpu.vector_store %arg4[%c0_22, %c0_23], %75 {strides = array<i32>} : memref<8x128xf32, #tpu.memory_space<vmem>>, vector<8x128xf32>,
    return
  }
  func.func @transform_0(%arg0: i32, %arg1: memref<1xi32, #tpu.memory_space<smem>>) -> (i32, i32) {
    %c0_i32 = arith.constant 0 : i32
    %c0_i32_0 = arith.constant 0 : i32
    %c0_i32_1 = arith.constant 0 : i32
    return %c0_i32, %c0_i32_0 : i32, i32
  }
  func.func @transform_1(%arg0: i32, %arg1: memref<1xi32, #tpu.memory_space<smem>>) -> (i32, i32) {
    %c0_i32 = arith.constant 0 : i32
    %c0_i32_0 = arith.constant 0 : i32
    %c0_i32_1 = arith.constant 0 : i32
    return %c0_i32, %c0_i32_0 : i32, i32
  }
  func.func @transform_2(%arg0: i32, %arg1: memref<1xi32, #tpu.memory_space<smem>>) -> (i32, i32) {
    %c0_i32 = arith.constant 0 : i32
    %c0_i32_0 = arith.constant 0 : i32
    return %arg0, %c0_i32 : i32, i32
  }
}

</mosaic_0001>

<llo_original>
// kernel: horde_forward.1
$region0: #{horde_forward.1}
  #allocation0 [shape = 'u32[]', space=smem, size = 0x4, offset = 0x4, fixed_abs, tag = 'smem constant byte address 0x4 - core index']
  #allocation1 [shape = 'u32[72,128]{1,0:T(1,128)}', space=vmem, size = 0x9000, scoped, tag = 'internal scratch']
  #allocation2 [shape = 's32[1]{0}', space=sflag, size = 0x4, scoped, tag = 'scoped memory for horde_forward.1']
  #allocation3 [shape = 's32[1]{0:T(128)S(6)}', space=smem, size = 0x200, scoped, tag = 'prefetched SMEM operand 0']
  %s0 = inlined_call_operand.<no memory space> [shape: s32[1], index: 0, kind: input, shape index: {}]
  %s1 = inlined_call_operand.hbm [shape: bf16[128,128], index: 1, kind: input, shape index: {}]
  %s2 = inlined_call_operand.vmem [shape: f32[1,128], index: 2, kind: input, shape index: {}]
  %s3 = inlined_call_operand.vmem [shape: f32[8,128], index: 3, kind: output, shape index: {}]
  %s4 = sld [smem:[#allocation0]]
  $region22: #{horde_forward.1} parent=0
    _
  %s6 = ssub.s32 1, %s4
  %s7 = scalar_select 0, %s6, %s4
  %8 = sst [smem:[#allocation3]] %s0
  $region1: #{horde_forward.1} parent=0
    #allocation4 [shape = 'u8[32768]{0}', space=vmem, size = 0x8000, scoped, tag = 'input window, operand 1, single buffered']
    #allocation5 [shape = 's32[1]{0}', space=sflag, size = 0x4, scoped, tag = 'scoped memory for horde_forward.1']
    %9 = vsyncpa [#allocation5], 0
    // Predicated region
    $region2: #{horde_forward.1} parent=1 // pred_check
      _
    $region3: #{horde_forward.1} parent=1 // pred_check_branch
      %11 = sbr.rel (0) target = $region5
    $region4: #{horde_forward.1} parent=1 // pred_region
      %13 = vsyncadd [#allocation5], 0
      %s14 = sshll.u32 %s1, 4
      %s15 = int_to_ptr.hbm [resolvable:$true] %s14
      %s16 = sshll.u32 [#allocation4], 4
      %s17 = int_to_ptr.vmem [resolvable:$true] %s16
      %22 = dma.hbm_to_vmem [thread:$0]  %s15, 1024, %s17, [#allocation5], 64, 64, 4
    $region5: #{horde_forward.1} parent=1 // pred_fallthru
      _
    // Predicated region
    $region6: #{horde_forward.1} parent=1 // pred_check
      _
    $region7: #{horde_forward.1} parent=1 // pred_check_branch
      %24 = sbr.rel (0) target = $region9
    $region8: #{horde_forward.1} parent=1 // pred_region
      _
    $region9: #{horde_forward.1} parent=1 // pred_fallthru
      _
    // Predicated region
    $region10: #{horde_forward.1} parent=1 // pred_check
      _
    $region11: #{horde_forward.1} parent=1 // pred_check_branch
      %26 = sbr.rel (0) target = $region13
    $region12: #{horde_forward.1} parent=1 // pred_region
      %28 = dma.done [#allocation5], 1024
    $region13: #{horde_forward.1} parent=1 // pred_fallthru
      _
    %s29 = sld [smem:[#allocation3]]
    %s30 = smul.u32 0, 2654435769
    %s31 = sxor.u32 %s29, %s30
    %s32 = sshrl.u32 %s31, 16
    %s33 = sxor.u32 %s31, %s32
    %s34 = smul.u32 %s33, 2146120493
    %s35 = sshrl.u32 %s34, 15
    %s36 = sxor.u32 %s34, %s35
    %s37 = smul.u32 %s36, 2221516427
    %s38 = sshrl.u32 %s37, 16
    %s39 = sxor.u32 %s37, %s38
    %v40 = vlaneseq
    %v41 = vshrl.u32 %v40, 7
    %v42 = vlaneseq
    %v43 = vand.u32 %v42, 127
    %v44 = vmul.u32 %v41, 128
    %v45 = vadd.s32 %v44, %v43
    %v46 = vstv %s39
    %v47 = vadd.s32 %v45, %v46
    %v48 = vshrl.u32 %v47, 16
    %v49 = vxor.u32 %v47, %v48
    %v50 = vmul.u32 %v49, 2146120493
    %v51 = vshrl.u32 %v50, 15
    %v52 = vxor.u32 %v50, %v51
    %v53 = vmul.u32 %v52, 2221516427
    %v54 = vshrl.u32 %v53, 16
    %v55 = vxor.u32 %v53, %v54
    %v56 = vxor.u32 %v45, %v46
    %v57 = vadd.s32 %v56, 2245558443
    %v58 = vshrl.u32 %v57, 16
    %v59 = vxor.u32 %v57, %v58
    %v60 = vmul.u32 %v59, 2146120493
    %v61 = vshrl.u32 %v60, 15
    %v62 = vxor.u32 %v60, %v61
    %v63 = vmul.u32 %v62, 2221516427
    %v64 = vshrl.u32 %v63, 16
    %v65 = vxor.u32 %v63, %v64
    %v66 = vshrl.u32 %v55, 8
    %v67 = vcvt.s32.f32 %v66
    %v68 = vadd.f32 %v67, 0.5
    %v69 = vmul.f32 %v68, 5.9604645e-08
    %v70 = vshrl.u32 %v65, 8
    %v71 = vcvt.s32.f32 %v70
    %v72 = vadd.f32 %v71, 0.5
    %v73 = vmul.f32 %v72, 5.9604645e-08
    %v74 = vlog2.pop %v69
    %v75 = vmul.f32 %v74, 0.6931472
    %v76 = vmul.f32 %v75, -2.0
    %v77 = vrsqrt.pop %v76
    %v78 = vmul.f32 %v77, %v76
    %v79 = vmul.f32 %v78, %v77
    %v80 = vmul.f32 0.5, %v79
    %v81 = vsub.f32 1.5, %v80
    %v82 = vmul.f32 %v77, %v81
    %v83 = vmul.f32 %v76, %v82
    %vm84 = vcmp.eq.f32.partialorder %v76, inf
    %v85 = vsel %vm84, %v76, %v83
    %vm86 = vcmp.eq.f32.partialorder %v76, 0.0
    %v87 = vand.u32 %v76, 2147483648
    %v88 = vsel %vm86, %v87, %v85
    %v89 = vmul.f32 %v73, 6.2831855
    %v90 = vand.u32 2147483647, %v89
    %vm91 = vcmp.le.f32.partialorder %v90, 0.7853982
    %vm92 = vcmp.lt.s32.totalorder %v89, 0
    %v93 = vand.u32 %v89, 2139095040
    %v94 = vshrl.u32 %v93, 23
    %v95 = vsub.s32 %v94, 127
    %v96 = vand.u32 2147483647, %v89
    %v97 = vand.u32 %v96, 8388607
    %v98 = vor.u32 %v97, 8388608
    %v99 = vsub.s32 0, %v98
    %v100 = vadd.s32 %v95, 1
    %vm101 = vcmp.gt.s32.totalorder %v100, 0
    %v102 = vsel %vm101, %v100, 0
    %v103 = vshrl.u32 %v102, 5
    %v104 = vand.u32 %v102, 31
    %v105 = vsub.s32 32, %v104
    %v106 = vshrl.u32 683565275, %v105
    %v107 = vshll.u32 683565275, %v104
    %v108 = vshrl.u32 2475754826, %v105
    %v109 = vor.u32 %v107, %v108
    %v110 = vshll.u32 2475754826, %v104
    %v111 = vshrl.u32 2131351028, %v105
    %v112 = vor.u32 %v110, %v111
    %v113 = vshll.u32 2131351028, %v104
    %v114 = vshrl.u32 2102212464, %v105
    %v115 = vor.u32 %v113, %v114
    %v116 = vshll.u32 2102212464, %v104
    %v117 = vshrl.u32 920167782, %v105
    %v118 = vor.u32 %v116, %v117
    %v119 = vshll.u32 920167782, %v104
    %v120 = vshrl.u32 1326507024, %v105
    %v121 = vor.u32 %v119, %v120
    %vm122 = vcmp.lt.s32.totalorder %v103, 1
    %vm123 = vcmp.lt.s32.totalorder %v103, 2
    %vm124 = vcmp.lt.s32.totalorder %v103, 3
    %vm125 = vcmp.lt.s32.totalorder %v103, 4
    %v126 = vsel %vm122, %v106, %v109
    %v127 = vsel %vm125, %v115, 2102212464
    %v128 = vsel %vm124, %v112, %v127
    %v129 = vsel %vm123, %v126, %v128
    %v130 = vsel %vm122, %v109, %v112
    %v131 = vsel %vm125, %v118, 920167782
    %v132 = vsel %vm124, %v115, %v131
    %v133 = vsel %vm123, %v130, %v132
    %v134 = vsel %vm122, %v112, %v115
    %v135 = vsel %vm125, %v121, 1326507024
    %v136 = vsel %vm124, %v118, %v135
    %v137 = vsel %vm123, %v134, %v136
    %v138 = vshll.u32 %v98, 8
    %v139 = vand.u32 %v138, 65535
    %v140 = vshrl.u32 %v138, 16
    %v141 = vand.u32 %v137, 65535
    %v142 = vshrl.u32 %v137, 16
    %v143 = vmul.u32 %v139, %v141
    %v144 = vmul.u32 %v139, %v142
    %v145 = vmul.u32 %v140, %v141
    %v146 = vmul.u32 %v140, %v142
    %v147 = vshll.u32 %v144, 16
    %v148 = vshrl.u32 %v144, 16
    %v149 = vshll.u32 %v145, 16
    %v150 = vshrl.u32 %v145, 16
    %vm151 = vc.u32 %v143, %v147
    %v152 = vsel %vm151, 1, 0
    %v153 = vadd.s32 %v143, %v147
    %v154 = vadd.s32 %v146, %v152
    %vm155 = vc.u32 %v153, %v149
    %v156 = vsel %vm155, 1, 0
    %v157 = vadd.s32 %v153, %v149
    %v158 = vadd.s32 %v154, %v156
    %v159 = vadd.s32 %v158, %v148
    %v160 = vadd.s32 %v159, %v150
    %v161 = vand.u32 %v138, 65535
    %v162 = vshrl.u32 %v138, 16
    %v163 = vand.u32 %v133, 65535
    %v164 = vshrl.u32 %v133, 16
    %v165 = vmul.u32 %v161, %v163
    %v166 = vmul.u32 %v161, %v164
    %v167 = vmul.u32 %v162, %v163
    %v168 = vmul.u32 %v162, %v164
    %v169 = vshll.u32 %v166, 16
    %v170 = vshrl.u32 %v166, 16
    %v171 = vshll.u32 %v167, 16
    %v172 = vshrl.u32 %v167, 16
    %vm173 = vc.u32 %v165, %v169
    %v174 = vsel %vm173, 1, 0
    %v175 = vadd.s32 %v165, %v169
    %v176 = vadd.s32 %v168, %v174
    %vm177 = vc.u32 %v175, %v171
    %v178 = vsel %vm177, 1, 0
    %v179 = vadd.s32 %v175, %v171
    %v180 = vadd.s32 %v176, %v178
    %v181 = vadd.s32 %v180, %v170
    %v182 = vadd.s32 %v181, %v172
    %v183 = vmul.u32 %v138, %v129
    %v184 = vadd.s32 %v160, %v179
    %vm185 = vc.u32 %v160, %v179
    %v186 = vadd.s32 %v182, 1
    %v187 = vsel %vm185, %v186, %v182
    %v188 = vadd.s32 %v183, %v187
    %v189 = vadd.s32 %v188, 536870912
    %v190 = vshrl.u32 %v189, 30
    %v191 = vshll.u32 %v190, 30
    %v192 = vsub.s32 %v188, %v191
    %vm193 = vcmp.lt.s32.totalorder %v192, 0
    %v194 = vsub.s32 0, %v192
    %v195 = vsel %vm193, %v194, %v192
    %v196 = vclz %v195
    %v197 = vsub.s32 %v196, 2
    %vm198 = vcmp.gt.s32.totalorder 0, %v197
    %v199 = vsel %vm198, 0, %v197
    %v200 = vsub.s32 32, %v199
    %v201 = vshll.u32 %v192, %v199
    %v202 = vshrl.u32 %v184, %v200
    %v203 = vor.u32 %v201, %v202
    %v204 = vsub.s32 4294967266, %v199
    %v205 = vadd.s32 %v204, 127
    %v206 = vshll.u32 %v205, 23
    %v207 = vor.u32 4788187, %v206
    %v208 = vand.u32 2147483647, %v207
    %v210 = vcvt.s32.f32 %v203
    %v211 = vmul.f32 %v210, %v208
    %v212 = vxor.u32 %v211, 2147483648
    %v213 = vsel %vm92, %v212, %v211
    %v214 = vsub.s32 4, %v190
    %v215 = vsel %vm92, %v214, %v190
    %v216 = vsel %vm91, %v89, %v213
    %v217 = vsel %vm91, 0, %v215
    %v218 = vmul.f32 %v216, %v216
    %v219 = vmul.f32 %v218, -0.001358992
    %v220 = vadd.f32 %v219, 0.041655596
    %v221 = vmul.f32 %v218, %v220
    %v222 = vadd.f32 %v221, -0.4999988
    %v223 = vmul.f32 %v218, %v222
    %v224 = vadd.f32 1.0, %v223
    %v225 = vmul.f32 %v216, %v216
    %v226 = vmul.f32 %v225, -0.00019511016
    %v227 = vadd.f32 %v226, 0.008332121
    %v228 = vmul.f32 %v225, %v227
    %v229 = vadd.f32 %v228, -0.16666654
    %v230 = vmul.f32 %v225, %v229
    %v231 = vadd.f32 %v230, 1.0
    %v232 = vmul.f32 %v231, %v216
    %vm233 = vweird.f32 %v89
    %v234 = vand.u32 %v217, 3
    %vm235 = vcmp.lt.s32.totalorder %v234, 2
    %vm236 = vcmp.eq.s32.totalorder %v234, 0
    %v237 = vxor.u32 %v232, 2147483648
    %v238 = vsel %vm236, %v224, %v237
    %vm239 = vcmp.eq.s32.totalorder %v234, 2
    %v240 = vxor.u32 %v224, 2147483648
    %v241 = vsel %vm239, %v240, %v232
    %v242 = vsel %vm235, %v238, %v241
    %v243 = vsel %vm233, nan, %v242
    %v244 = vmul.f32 %v88, %v243
    %v245 = vpack.c.bf16 %v244, %v244
    %v246 = vld [vmem:[#allocation4] sm:$0xf]
    %v247 = vld [vmem:[#allocation4 + $0x4] sm:$0xf]
    %v248 = vld [vmem:[#allocation4 + $0x8] sm:$0xf]
    %v249 = vld [vmem:[#allocation4 + $0xc] sm:$0xf]
    %v250 = vld [vmem:[#allocation4 + $0x10] sm:$0xf]
    %v251 = vld [vmem:[#allocation4 + $0x14] sm:$0xf]
    %v252 = vld [vmem:[#allocation4 + $0x18] sm:$0xf]
    %v253 = vld [vmem:[#allocation4 + $0x1c] sm:$0xf]
    %v254 = vld [vmem:[#allocation4 + $0x20] sm:$0xf]
    %v255 = vld [vmem:[#allocation4 + $0x24] sm:$0xf]
    %v256 = vld [vmem:[#allocation4 + $0x28] sm:$0xf]
    %v257 = vld [vmem:[#allocation4 + $0x2c] sm:$0xf]
    %v258 = vld [vmem:[#allocation4 + $0x30] sm:$0xf]
    %v259 = vld [vmem:[#allocation4 + $0x34] sm:$0xf]
    %v260 = vld [vmem:[#allocation4 + $0x38] sm:$0xf]
    %v261 = vld [vmem:[#allocation4 + $0x3c] sm:$0xf]
    %v262 = vld [vmem:[%s2] sm:$0x1]
    %v264 = vperm.slane %v262, 0
    %v282 = vunpack.c.l.b16 %v246
    %v283 = vunpack.c.l.b16 %v247
    %v284 = vunpack.c.l.b16 %v248
    %v285 = vunpack.c.l.b16 %v249
    %v286 = vunpack.c.l.b16 %v250
    %v287 = vunpack.c.l.b16 %v251
    %v288 = vunpack.c.l.b16 %v252
    %v289 = vunpack.c.l.b16 %v253
    %v290 = vunpack.c.l.b16 %v254
    %v291 = vunpack.c.l.b16 %v255
    %v292 = vunpack.c.l.b16 %v256
    %v293 = vunpack.c.l.b16 %v257
    %v294 = vunpack.c.l.b16 %v258
    %v295 = vunpack.c.l.b16 %v259
    %v296 = vunpack.c.l.b16 %v260
    %v297 = vunpack.c.l.b16 %v261
    %v298 = vpack.c.b16 %v283, %v282
    %v299 = vpack.c.b16 %v285, %v284
    %v300 = vpack.c.b16 %v287, %v286
    %v301 = vpack.c.b16 %v289, %v288
    %v302 = vpack.c.b16 %v291, %v290
    %v303 = vpack.c.b16 %v293, %v292
    %v304 = vpack.c.b16 %v295, %v294
    %v305 = vpack.c.b16 %v297, %v296
    %314 = vmatpush.bf16.msra.mxu0 %v305
    %315 = vmatpush.bf16.msra.mxu0 %v304
    %316 = vmatpush.bf16.msra.mxu0 %v303
    %317 = vmatpush.bf16.msra.mxu0 %v302
    %318 = vmatpush.bf16.msra.mxu0 %v301
    %319 = vmatpush.bf16.msra.mxu0 %v300
    %320 = vmatpush.bf16.msra.mxu0 %v299
    %321 = vmatpush.bf16.msra.mxu0 %v298
    %322 = vmatmul.bf16.gmra.mxu0 %v245
    %v323 = vpop.f32.mrf.mxu0
    %v324 = vadd.f32 %v264, %v323
    %v325 = vpop.f32.mrf.mxu0
    %326 = vdwg.mxu0
    %327 = vst [vmem:[%s3] sm:$0xff] %v324
    // Predicated region
    $region14: #{horde_forward.1} parent=1 // pred_check
      _
    $region15: #{horde_forward.1} parent=1 // pred_check_branch
      %329 = sbr.rel (0) target = $region17
    $region16: #{horde_forward.1} parent=1 // pred_region
      _
    $region17: #{horde_forward.1} parent=1 // pred_fallthru
      _
    // Predicated region
    $region18: #{horde_forward.1} parent=1 // pred_check
      _
    $region19: #{horde_forward.1} parent=1 // pred_check_branch
      %331 = sbr.rel (0) target = $region21
    $region20: #{horde_forward.1} parent=1 // pred_region
      _
    $region21: #{horde_forward.1} parent=1 // pred_fallthru
      _
    %332 = vsyncpa [#allocation5], 1

</llo_original>
